<compile_context>
chip_gen: v7x
topology: tpu7x:2x2x1
jax: 0.10.0
libtpu: 0.0.40
codegen_flags: <defaults>
</compile_context>

<pallas_src>
import functools

import jax
import jax.numpy as jnp
from jax import lax
from jax.experimental import pallas as pl
from jax.experimental.pallas import tpu as pltpu

IN_DIM = 784
HID_DIM = 100
OUT_DIM = 10

HID_PAD = 128   # hidden width padded to a full lane group
OUT_PAD = 16    # output width padded to a sublane group (output stored transposed)


def mlp_kernel(x_ref, w1_ref, b1_ref, w2t_ref, b2t_ref, ot_ref):
    # Layer 1: cast x to bf16 in-kernel (VPU), bf16 x bf16 -> f32 acc on MXU.
    xb = x_ref[...].astype(jnp.bfloat16)
    h = jnp.dot(xb, w1_ref[...], preferred_element_type=jnp.float32)      # [TB, 128]
    h = jnp.maximum(h + b1_ref[...], 0.0)                                  # bias + ReLU (f32)
    # Layer 2, produced transposed: out_t[o, b] = sum_k w2t[o, k] * h[b, k]
    out_t = lax.dot_general(
        w2t_ref[...], h,
        dimension_numbers=(((1,), (1,)), ((), ())),
        preferred_element_type=jnp.float32)                                # [16, TB]
    ot_ref[...] = (out_t + b2t_ref[...]).astype(ot_ref.dtype)


def prepare_params(w1, b1, w2, b2):
    """One-time pad/cast of parameters (hoisted out of the per-call path).

    Convention: w1 is [784, 100], w2 is [100, 10] (i.e. torch weights already
    transposed so the kernel computes x @ W); b1: [100], b2: [10]."""
    w1p = jnp.zeros((IN_DIM, HID_PAD), jnp.bfloat16)
    w1p = w1p.at[:, :HID_DIM].set(w1.astype(jnp.bfloat16))
    b1p = jnp.zeros((1, HID_PAD), jnp.float32)
    b1p = b1p.at[:, :HID_DIM].set(b1.reshape(1, HID_DIM).astype(jnp.float32))
    # Second layer kept in f32 (tiny now that the output dim is 16) and stored
    # transposed as [OUT_PAD, HID_PAD].
    w2tp = jnp.zeros((OUT_PAD, HID_PAD), jnp.float32)
    w2tp = w2tp.at[:OUT_DIM, :HID_DIM].set(w2.astype(jnp.float32).T)
    b2tp = jnp.zeros((OUT_PAD, 1), jnp.float32)
    b2tp = b2tp.at[:OUT_DIM, 0].set(b2.astype(jnp.float32))
    return w1p, b1p, w2tp, b2tp


@functools.partial(jax.jit, static_argnames=("tb",))
def toy_model_forward(x, w1p, b1p, w2tp, b2tp, *, tb=2048):
    """x: [B, 784] f32 (bf16 also accepted); params from prepare_params()."""
    B = x.shape[0]

    if B <= tb:
        TB = B                       # single block == full array (any B allowed)
    else:
        TB = (tb // 128) * 128       # multi-block: keep the batch tile (8,128)-aligned
    grid = (pl.cdiv(B, TB),)         # ragged trailing block handled by Pallas masking

    itemsize = jnp.dtype(x.dtype).itemsize
    flops = 2 * B * (IN_DIM * HID_PAD + HID_PAD * OUT_PAD)
    bytes_accessed = (
        B * IN_DIM * itemsize                                   # x read exactly once
        + IN_DIM * HID_PAD * 2                                  # w1 (bf16)
        + HID_PAD * 4 + OUT_PAD * HID_PAD * 4 + OUT_PAD * 4     # b1, w2^T, b2^T
        + OUT_PAD * B * 4)                                      # transposed f32 output

    # Double-buffered f32 x tile dominates VMEM.  Lift v5e's 16 MiB default
    # scoped limit while leaving headroom under v7x's 64 MiB physical VMEM.
    vmem_limit = int(min(60 * 1024 * 1024,
                         max(32 * 1024 * 1024, 3 * TB * IN_DIM * 4)))

    out_t = pl.pallas_call(
        mlp_kernel,
        out_shape=jax.ShapeDtypeStruct((OUT_PAD, B), jnp.float32),
        grid=grid,
        in_specs=[
            pl.BlockSpec((TB, IN_DIM), lambda i: (i, 0)),         # x tile (pipelined)
            pl.BlockSpec((IN_DIM, HID_PAD), lambda i: (0, 0)),    # w1 (resident)
            pl.BlockSpec((1, HID_PAD), lambda i: (0, 0)),         # b1
            pl.BlockSpec((OUT_PAD, HID_PAD), lambda i: (0, 0)),   # w2^T
            pl.BlockSpec((OUT_PAD, 1), lambda i: (0, 0)),         # b2^T
        ],
        out_specs=pl.BlockSpec((OUT_PAD, TB), lambda i: (0, i)),  # lane-dense (batch on lanes)
        compiler_params=pltpu.CompilerParams(
            dimension_semantics=("parallel",),
            vmem_limit_bytes=vmem_limit),
        cost_estimate=pl.CostEstimate(
            flops=flops, transcendentals=0, bytes_accessed=bytes_accessed),
    )(x, w1p, b1p, w2tp, b2tp)

    # Tiny slice + transpose (~100 B/row) back to the torch layout [B, 10].
    return out_t[:OUT_DIM, :].T


def init_params(key):
    # Deterministic init mimicking nn.Linear's uniform(-1/sqrt(fan_in), ...).
    k1, k2, k3, k4 = jax.random.split(key, 4)
    bound1 = 1.0 / jnp.sqrt(IN_DIM)
    bound2 = 1.0 / jnp.sqrt(HID_DIM)
    w1 = jax.random.uniform(k1, (IN_DIM, HID_DIM), jnp.float32, -bound1, bound1)
    b1 = jax.random.uniform(k2, (HID_DIM,), jnp.float32, -bound1, bound1)
    w2 = jax.random.uniform(k3, (HID_DIM, OUT_DIM), jnp.float32, -bound2, bound2)
    b2 = jax.random.uniform(k4, (OUT_DIM,), jnp.float32, -bound2, bound2)
    return w1, b1, w2, b2


def _reference(x, w1, b1, w2, b2, *, emulate_bf16):
    if emulate_bf16:
        xr = x.astype(jnp.bfloat16).astype(jnp.float32)
        w1r = w1.astype(jnp.bfloat16).astype(jnp.float32)
    else:
        xr, w1r = x, w1
    h = jnp.maximum(xr @ w1r + b1[None, :], 0.0)
    return h @ w2 + b2[None, :]


if __name__ == "__main__":
    key = jax.random.PRNGKey(0)
    kx, kp = jax.random.split(key)
    w1, b1, w2, b2 = init_params(kp)
    params = prepare_params(w1, b1, w2, b2)   # hoisted: padded/cast once

    # --- small test (single tile, full-array blocks) ---
    B = 8
    x = jax.random.normal(kx, (B, IN_DIM), jnp.float32)
    out = jax.block_until_ready(toy_model_forward(x, *params))
    assert out.shape == (B, OUT_DIM)
    ref_bf16 = _reference(x, w1, b1, w2, b2, emulate_bf16=True)
    ref_f32 = _reference(x, w1, b1, w2, b2, emulate_bf16=False)
    assert jnp.allclose(out, ref_bf16, atol=2e-3, rtol=2e-3), "mismatch vs bf16 ref"
    assert jnp.allclose(out, ref_f32, atol=3e-2, rtol=3e-2), "mismatch vs f32 ref"

    # --- multi-tile test with a ragged trailing block (grid + boundary masking) ---
    B2 = 1000
    x2 = jax.random.normal(jax.random.PRNGKey(1), (B2, IN_DIM), jnp.float32)
    out2 = jax.block_until_ready(toy_model_forward(x2, *params, tb=256))
    assert out2.shape == (B2, OUT_DIM)
    ref2 = _reference(x2, w1, b1, w2, b2, emulate_bf16=True)
    assert jnp.allclose(out2, ref2, atol=2e-3, rtol=2e-3), "multi-tile mismatch"

    print("KERNEL_OK")
</pallas_src>

<mosaic_0001>
module attributes {stable_mosaic.version = 11 : i64} {
  func.func @mlp_kernel(%arg0: i32, %arg1: memref<8x784xf32, #tpu.memory_space<vmem>>, %arg2: memref<784x128xbf16, #tpu.memory_space<vmem>>, %arg3: memref<1x128xf32, #tpu.memory_space<vmem>>, %arg4: memref<16x128xf32, #tpu.memory_space<vmem>>, %arg5: memref<16x1xf32, #tpu.memory_space<vmem>>, %arg6: memref<16x8xf32, #tpu.memory_space<vmem>>) attributes {dimension_semantics = [#tpu.dimension_semantics<parallel>], iteration_bounds = array<i64: 1>, scalar_prefetch = 0 : i64, scratch_operands = 0 : i64, tpu.core_type = #tpu.core_type<tc>, window_params = [{transform_indices = @transform_0, window_bounds = array<i64: 8, 784>}, {pipeline_mode = #tpu.pipeline_mode<synchronous>, transform_indices = @transform_1, window_bounds = array<i64: 784, 128>}, {pipeline_mode = #tpu.pipeline_mode<synchronous>, transform_indices = @transform_2, window_bounds = array<i64: 1, 128>}, {pipeline_mode = #tpu.pipeline_mode<synchronous>, transform_indices = @transform_3, window_bounds = array<i64: 16, 128>}, {pipeline_mode = #tpu.pipeline_mode<synchronous>, transform_indices = @transform_4, window_bounds = array<i64: 16, 1>}, {transform_indices = @transform_5, window_bounds = array<i64: 16, 8>}]} {
    %c0 = arith.constant 0 : index
    %c0_0 = arith.constant 0 : index
    %0 = vector.load %arg1[%c0, %c0_0] : memref<8x784xf32, #tpu.memory_space<vmem>>, vector<8x784xf32>
    %1 = arith.truncf %0 : vector<8x784xf32> to vector<8x784xbf16>
    %c0_1 = arith.constant 0 : index
    %c0_2 = arith.constant 0 : index
    %2 = vector.load %arg2[%c0_1, %c0_2] : memref<784x128xbf16, #tpu.memory_space<vmem>>, vector<784x128xbf16>
    %cst = arith.constant dense<0.000000e+00> : vector<8x128xf32>
    %3 = tpu.matmul %1, %2, %cst {dimension_numbers = #tpu.dot_dimension_numbers<[1], [0], [0], [1], [0, 0, 1, 1], [], []>} : vector<8x784xbf16>, vector<784x128xbf16>, vector<8x128xf32> -> vector<8x128xf32>
    %c0_3 = arith.constant 0 : index
    %c0_4 = arith.constant 0 : index
    %4 = vector.load %arg3[%c0_3, %c0_4] : memref<1x128xf32, #tpu.memory_space<vmem>>, vector<1x128xf32>
    %5 = vector.broadcast %4 : vector<1x128xf32> to vector<8x128xf32>
    %6 = arith.addf %3, %5 : vector<8x128xf32>
    %cst_5 = arith.constant 0.000000e+00 : f32
    %7 = vector.broadcast %cst_5 : f32 to vector<8x128xf32>
    %8 = arith.maximumf %6, %7 : vector<8x128xf32>
    %c0_6 = arith.constant 0 : index
    %c0_7 = arith.constant 0 : index
    %9 = vector.load %arg4[%c0_6, %c0_7] : memref<16x128xf32, #tpu.memory_space<vmem>>, vector<16x128xf32>
    %cst_8 = arith.constant dense<0.000000e+00> : vector<16x8xf32>
    %10 = tpu.matmul %9, %8, %cst_8 {dimension_numbers = #tpu.dot_dimension_numbers<[1], [1], [0], [0], [0, 0, 1, 0], [], []>} : vector<16x128xf32>, vector<8x128xf32>, vector<16x8xf32> -> vector<16x8xf32>
    %c0_9 = arith.constant 0 : index
    %c0_10 = arith.constant 0 : index
    %11 = vector.load %arg5[%c0_9, %c0_10] : memref<16x1xf32, #tpu.memory_space<vmem>>, vector<16x1xf32>
    %12 = vector.broadcast %11 : vector<16x1xf32> to vector<16x8xf32>
    %13 = arith.addf %10, %12 : vector<16x8xf32>
    %c0_11 = arith.constant 0 : index
    %c0_12 = arith.constant 0 : index
    %14 = vector.load %arg6[%c0_11, %c0_12] : memref<16x8xf32, #tpu.memory_space<vmem>>, vector<16x8xf32>
    tpu.vector_store %arg6[%c0_11, %c0_12], %13 {strides = array<i32>} : memref<16x8xf32, #tpu.memory_space<vmem>>, vector<16x8xf32>,
    return
  }
  func.func @transform_0(%arg0: i32) -> (i32, i32) {
    %c0_i32 = arith.constant 0 : i32
    %c0_i32_0 = arith.constant 0 : i32
    return %arg0, %c0_i32 : i32, i32
  }
  func.func @transform_1(%arg0: i32) -> (i32, i32) {
    %c0_i32 = arith.constant 0 : i32
    %c0_i32_0 = arith.constant 0 : i32
    %c0_i32_1 = arith.constant 0 : i32
    return %c0_i32, %c0_i32_0 : i32, i32
  }
  func.func @transform_2(%arg0: i32) -> (i32, i32) {
    %c0_i32 = arith.constant 0 : i32
    %c0_i32_0 = arith.constant 0 : i32
    %c0_i32_1 = arith.constant 0 : i32
    return %c0_i32, %c0_i32_0 : i32, i32
  }
  func.func @transform_3(%arg0: i32) -> (i32, i32) {
    %c0_i32 = arith.constant 0 : i32
    %c0_i32_0 = arith.constant 0 : i32
    %c0_i32_1 = arith.constant 0 : i32
    return %c0_i32, %c0_i32_0 : i32, i32
  }
  func.func @transform_4(%arg0: i32) -> (i32, i32) {
    %c0_i32 = arith.constant 0 : i32
    %c0_i32_0 = arith.constant 0 : i32
    %c0_i32_1 = arith.constant 0 : i32
    return %c0_i32, %c0_i32_0 : i32, i32
  }
  func.func @transform_5(%arg0: i32) -> (i32, i32) {
    %c0_i32 = arith.constant 0 : i32
    %c0_i32_0 = arith.constant 0 : i32
    return %c0_i32, %arg0 : i32, i32
  }
}

</mosaic_0001>

<llo_original>
// kernel: toy_model_forward.1
$region0: #{toy_model_forward.1}
  #allocation0 [shape = 'u32[]', space=smem, size = 0x4, offset = 0x4, fixed_abs, tag = 'smem constant byte address 0x4 - core index']
  #allocation1 [shape = 'u32[144,128]{1,0:T(1,128)}', space=vmem, size = 0x12000, scoped, tag = 'internal scratch']
  %s0 = inlined_call_operand.hbm [shape: f32[8,784], index: 0, kind: input, shape index: {}]
  %s1 = inlined_call_operand.hbm [shape: bf16[784,128], index: 1, kind: input, shape index: {}]
  %s2 = inlined_call_operand.vmem [shape: f32[1,128], index: 2, kind: input, shape index: {}]
  %s3 = inlined_call_operand.vmem [shape: f32[16,128], index: 3, kind: input, shape index: {}]
  %s4 = inlined_call_operand.vmem [shape: f32[16,1], index: 4, kind: input, shape index: {}]
  %s5 = inlined_call_operand.vmem [shape: f32[16,8], index: 5, kind: output, shape index: {}]
  %s6 = sld [smem:[#allocation0]]
  $region38: #{toy_model_forward.1} parent=0
    _
  %s8 = ssub.s32 1, %s6
  %s9 = scalar_select 0, %s8, %s6
  $region1: #{toy_model_forward.1} parent=0
    #allocation2 [shape = 'u8[28672]{0}', space=vmem, size = 0x7000, scoped, tag = 'input window, operand 0, single buffered']
    #allocation3 [shape = 's32[1]{0}', space=sflag, size = 0x4, scoped, tag = 'scoped memory for toy_model_forward.1']
    #allocation4 [shape = 'u8[200704]{0}', space=vmem, size = 0x31000, scoped, tag = 'input window, operand 1, single buffered']
    #allocation5 [shape = 's32[1]{0}', space=sflag, size = 0x4, scoped, tag = 'scoped memory for toy_model_forward.1']
    %10 = vsyncpa [#allocation3], 0
    %11 = vsyncpa [#allocation5], 0
    // Predicated region
    $region2: #{toy_model_forward.1} parent=1 // pred_check
      _
    $region3: #{toy_model_forward.1} parent=1 // pred_check_branch
      %13 = sbr.rel (0) target = $region5
    $region4: #{toy_model_forward.1} parent=1 // pred_region
      %s15 = ssub.s32 896, 896
      %16 = vsyncadd [#allocation3], %s15
      %s18 = sshll.u32 [#allocation2], 4
      %s19 = int_to_ptr.vmem [resolvable:$true] %s18
      %21 = dma.hbm_to_vmem [thread:$0]  %s0, 896, %s19, [#allocation3]
    $region5: #{toy_model_forward.1} parent=1 // pred_fallthru
      _
    // Predicated region
    $region6: #{toy_model_forward.1} parent=1 // pred_check
      _
    $region7: #{toy_model_forward.1} parent=1 // pred_check_branch
      %23 = sbr.rel (0) target = $region9
    $region8: #{toy_model_forward.1} parent=1 // pred_region
      %s25 = ssub.s32 6272, 6272
      %26 = vsyncadd [#allocation5], %s25
      %s27 = sshll.u32 [#allocation4], 4
      %s28 = int_to_ptr.vmem [resolvable:$true] %s27
      %33 = dma.hbm_to_vmem [thread:$0]  %s1, 6272, %s28, [#allocation5], 64, 64, 4
    $region9: #{toy_model_forward.1} parent=1 // pred_fallthru
      _
    // Predicated region
    $region10: #{toy_model_forward.1} parent=1 // pred_check
      _
    $region11: #{toy_model_forward.1} parent=1 // pred_check_branch
      %35 = sbr.rel (0) target = $region13
    $region12: #{toy_model_forward.1} parent=1 // pred_region
      _
    $region13: #{toy_model_forward.1} parent=1 // pred_fallthru
      _
    // Predicated region
    $region14: #{toy_model_forward.1} parent=1 // pred_check
      _
    $region15: #{toy_model_forward.1} parent=1 // pred_check_branch
      %37 = sbr.rel (0) target = $region17
    $region16: #{toy_model_forward.1} parent=1 // pred_region
      _
    $region17: #{toy_model_forward.1} parent=1 // pred_fallthru
      _
    // Predicated region
    $region18: #{toy_model_forward.1} parent=1 // pred_check
      _
    $region19: #{toy_model_forward.1} parent=1 // pred_check_branch
      %39 = sbr.rel (0) target = $region21
    $region20: #{toy_model_forward.1} parent=1 // pred_region
      _
    $region21: #{toy_model_forward.1} parent=1 // pred_fallthru
      _
    // Predicated region
    $region22: #{toy_model_forward.1} parent=1 // pred_check
      _
    $region23: #{toy_model_forward.1} parent=1 // pred_check_branch
      %41 = sbr.rel (0) target = $region25
    $region24: #{toy_model_forward.1} parent=1 // pred_region
      %42 = dma.done [#allocation3], 896
    $region25: #{toy_model_forward.1} parent=1 // pred_fallthru
      _
    // Predicated region
    $region26: #{toy_model_forward.1} parent=1 // pred_check
      _
    $region27: #{toy_model_forward.1} parent=1 // pred_check_branch
      %44 = sbr.rel (0) target = $region29
    $region28: #{toy_model_forward.1} parent=1 // pred_region
      %45 = dma.done [#allocation5], 6272
    $region29: #{toy_model_forward.1} parent=1 // pred_fallthru
      _
    %v47 = vld [vmem:[#allocation2] sm:$0xff]
    %v48 = vld [vmem:[#allocation2 + $0x8] sm:$0xff]
    %v49 = vld [vmem:[#allocation2 + $0x10] sm:$0xff]
    %v50 = vld [vmem:[#allocation2 + $0x18] sm:$0xff]
    %v51 = vld [vmem:[#allocation2 + $0x20] sm:$0xff]
    %v52 = vld [vmem:[#allocation2 + $0x28] sm:$0xff]
    %v53 = vld [vmem:[#allocation2 + $0x30] sm:$0xff]
    %v54 = vpack.c.bf16 %v47, %v47
    %v55 = vpack.c.bf16 %v48, %v48
    %v56 = vpack.c.bf16 %v49, %v49
    %v57 = vpack.c.bf16 %v50, %v50
    %v58 = vpack.c.bf16 %v51, %v51
    %v59 = vpack.c.bf16 %v52, %v52
    %v60 = vpack.c.bf16 %v53, %v53
    %v61 = vld [vmem:[#allocation4] sm:$0xf]
    %v62 = vld [vmem:[#allocation4 + $0x4] sm:$0xf]
    %v63 = vld [vmem:[#allocation4 + $0x8] sm:$0xf]
    %v64 = vld [vmem:[#allocation4 + $0xc] sm:$0xf]
    %v65 = vld [vmem:[#allocation4 + $0x10] sm:$0xf]
    %v66 = vld [vmem:[#allocation4 + $0x14] sm:$0xf]
    %v67 = vld [vmem:[#allocation4 + $0x18] sm:$0xf]
    %v68 = vld [vmem:[#allocation4 + $0x1c] sm:$0xf]
    %v69 = vld [vmem:[#allocation4 + $0x20] sm:$0xf]
    %v70 = vld [vmem:[#allocation4 + $0x24] sm:$0xf]
    %v71 = vld [vmem:[#allocation4 + $0x28] sm:$0xf]
    %v72 = vld [vmem:[#allocation4 + $0x2c] sm:$0xf]
    %v73 = vld [vmem:[#allocation4 + $0x30] sm:$0xf]
    %v74 = vld [vmem:[#allocation4 + $0x34] sm:$0xf]
    %v75 = vld [vmem:[#allocation4 + $0x38] sm:$0xf]
    %v76 = vld [vmem:[#allocation4 + $0x3c] sm:$0xf]
    %v77 = vld [vmem:[#allocation4 + $0x40] sm:$0xf]
    %v78 = vld [vmem:[#allocation4 + $0x44] sm:$0xf]
    %v79 = vld [vmem:[#allocation4 + $0x48] sm:$0xf]
    %v80 = vld [vmem:[#allocation4 + $0x4c] sm:$0xf]
    %v81 = vld [vmem:[#allocation4 + $0x50] sm:$0xf]
    %v82 = vld [vmem:[#allocation4 + $0x54] sm:$0xf]
    %v83 = vld [vmem:[#allocation4 + $0x58] sm:$0xf]
    %v84 = vld [vmem:[#allocation4 + $0x5c] sm:$0xf]
    %v85 = vld [vmem:[#allocation4 + $0x60] sm:$0xf]
    %v86 = vld [vmem:[#allocation4 + $0x64] sm:$0xf]
    %v87 = vld [vmem:[#allocation4 + $0x68] sm:$0xf]
    %v88 = vld [vmem:[#allocation4 + $0x6c] sm:$0xf]
    %v89 = vld [vmem:[#allocation4 + $0x70] sm:$0xf]
    %v90 = vld [vmem:[#allocation4 + $0x74] sm:$0xf]
    %v91 = vld [vmem:[#allocation4 + $0x78] sm:$0xf]
    %v92 = vld [vmem:[#allocation4 + $0x7c] sm:$0xf]
    %v93 = vld [vmem:[#allocation4 + $0x80] sm:$0xf]
    %v94 = vld [vmem:[#allocation4 + $0x84] sm:$0xf]
    %v95 = vld [vmem:[#allocation4 + $0x88] sm:$0xf]
    %v96 = vld [vmem:[#allocation4 + $0x8c] sm:$0xf]
    %v97 = vld [vmem:[#allocation4 + $0x90] sm:$0xf]
    %v98 = vld [vmem:[#allocation4 + $0x94] sm:$0xf]
    %v99 = vld [vmem:[#allocation4 + $0x98] sm:$0xf]
    %v100 = vld [vmem:[#allocation4 + $0x9c] sm:$0xf]
    %v101 = vld [vmem:[#allocation4 + $0xa0] sm:$0xf]
    %v102 = vld [vmem:[#allocation4 + $0xa4] sm:$0xf]
    %v103 = vld [vmem:[#allocation4 + $0xa8] sm:$0xf]
    %v104 = vld [vmem:[#allocation4 + $0xac] sm:$0xf]
    %v105 = vld [vmem:[#allocation4 + $0xb0] sm:$0xf]
    %v106 = vld [vmem:[#allocation4 + $0xb4] sm:$0xf]
    %v107 = vld [vmem:[#allocation4 + $0xb8] sm:$0xf]
    %v108 = vld [vmem:[#allocation4 + $0xbc] sm:$0xf]
    %v109 = vld [vmem:[#allocation4 + $0xc0] sm:$0xf]
    %v110 = vld [vmem:[#allocation4 + $0xc4] sm:$0xf]
    %v111 = vld [vmem:[#allocation4 + $0xc8] sm:$0xf]
    %v112 = vld [vmem:[#allocation4 + $0xcc] sm:$0xf]
    %v113 = vld [vmem:[#allocation4 + $0xd0] sm:$0xf]
    %v114 = vld [vmem:[#allocation4 + $0xd4] sm:$0xf]
    %v115 = vld [vmem:[#allocation4 + $0xd8] sm:$0xf]
    %v116 = vld [vmem:[#allocation4 + $0xdc] sm:$0xf]
    %v117 = vld [vmem:[#allocation4 + $0xe0] sm:$0xf]
    %v118 = vld [vmem:[#allocation4 + $0xe4] sm:$0xf]
    %v119 = vld [vmem:[#allocation4 + $0xe8] sm:$0xf]
    %v120 = vld [vmem:[#allocation4 + $0xec] sm:$0xf]
    %v121 = vld [vmem:[#allocation4 + $0xf0] sm:$0xf]
    %v122 = vld [vmem:[#allocation4 + $0xf4] sm:$0xf]
    %v123 = vld [vmem:[#allocation4 + $0xf8] sm:$0xf]
    %v124 = vld [vmem:[#allocation4 + $0xfc] sm:$0xf]
    %v125 = vld [vmem:[#allocation4 + $0x100] sm:$0xf]
    %v126 = vld [vmem:[#allocation4 + $0x104] sm:$0xf]
    %v127 = vld [vmem:[#allocation4 + $0x108] sm:$0xf]
    %v128 = vld [vmem:[#allocation4 + $0x10c] sm:$0xf]
    %v129 = vld [vmem:[#allocation4 + $0x110] sm:$0xf]
    %v130 = vld [vmem:[#allocation4 + $0x114] sm:$0xf]
    %v131 = vld [vmem:[#allocation4 + $0x118] sm:$0xf]
    %v132 = vld [vmem:[#allocation4 + $0x11c] sm:$0xf]
    %v133 = vld [vmem:[#allocation4 + $0x120] sm:$0xf]
    %v134 = vld [vmem:[#allocation4 + $0x124] sm:$0xf]
    %v135 = vld [vmem:[#allocation4 + $0x128] sm:$0xf]
    %v136 = vld [vmem:[#allocation4 + $0x12c] sm:$0xf]
    %v137 = vld [vmem:[#allocation4 + $0x130] sm:$0xf]
    %v138 = vld [vmem:[#allocation4 + $0x134] sm:$0xf]
    %v139 = vld [vmem:[#allocation4 + $0x138] sm:$0xf]
    %v140 = vld [vmem:[#allocation4 + $0x13c] sm:$0xf]
    %v141 = vld [vmem:[#allocation4 + $0x140] sm:$0xf]
    %v142 = vld [vmem:[#allocation4 + $0x144] sm:$0xf]
    %v143 = vld [vmem:[#allocation4 + $0x148] sm:$0xf]
    %v144 = vld [vmem:[#allocation4 + $0x14c] sm:$0xf]
    %v145 = vld [vmem:[#allocation4 + $0x150] sm:$0xf]
    %v146 = vld [vmem:[#allocation4 + $0x154] sm:$0xf]
    %v147 = vld [vmem:[#allocation4 + $0x158] sm:$0xf]
    %v148 = vld [vmem:[#allocation4 + $0x15c] sm:$0xf]
    %v149 = vld [vmem:[#allocation4 + $0x160] sm:$0xf]
    %v150 = vld [vmem:[#allocation4 + $0x164] sm:$0xf]
    %v151 = vld [vmem:[#allocation4 + $0x168] sm:$0xf]
    %v152 = vld [vmem:[#allocation4 + $0x16c] sm:$0xf]
    %v153 = vld [vmem:[#allocation4 + $0x170] sm:$0xf]
    %v154 = vld [vmem:[#allocation4 + $0x174] sm:$0xf]
    %v155 = vld [vmem:[#allocation4 + $0x178] sm:$0xf]
    %v156 = vld [vmem:[#allocation4 + $0x17c] sm:$0xf]
    %v157 = vld [vmem:[#allocation4 + $0x180] sm:$0xf]
    %v158 = vld [vmem:[#allocation4 + $0x184] sm:$0xf]
    %v159 = vld [vmem:[%s2] sm:$0x1]
    %v161 = vlaneseq
    %v162 = vshrl.u32 %v161, 7
    %v163 = vsub.s32 0, %v162
    %v164 = vrot.slane %v159, %v163
    %v264 = vunpack.c.l.b16 %v61
    %v265 = vunpack.c.l.b16 %v62
    %v266 = vunpack.c.l.b16 %v63
    %v267 = vunpack.c.l.b16 %v64
    %v268 = vunpack.c.l.b16 %v65
    %v269 = vunpack.c.l.b16 %v66
    %v270 = vunpack.c.l.b16 %v67
    %v271 = vunpack.c.l.b16 %v68
    %v272 = vunpack.c.l.b16 %v69
    %v273 = vunpack.c.l.b16 %v70
    %v274 = vunpack.c.l.b16 %v71
    %v275 = vunpack.c.l.b16 %v72
    %v276 = vunpack.c.l.b16 %v73
    %v277 = vunpack.c.l.b16 %v74
    %v278 = vunpack.c.l.b16 %v75
    %v279 = vunpack.c.l.b16 %v76
    %v280 = vunpack.c.l.b16 %v77
    %v281 = vunpack.c.l.b16 %v78
    %v282 = vunpack.c.l.b16 %v79
    %v283 = vunpack.c.l.b16 %v80
    %v284 = vunpack.c.l.b16 %v81
    %v285 = vunpack.c.l.b16 %v82
    %v286 = vunpack.c.l.b16 %v83
    %v287 = vunpack.c.l.b16 %v84
    %v288 = vunpack.c.l.b16 %v85
    %v289 = vunpack.c.l.b16 %v86
    %v290 = vunpack.c.l.b16 %v87
    %v291 = vunpack.c.l.b16 %v88
    %v292 = vunpack.c.l.b16 %v89
    %v293 = vunpack.c.l.b16 %v90
    %v294 = vunpack.c.l.b16 %v91
    %v295 = vunpack.c.l.b16 %v92
    %v296 = vunpack.c.l.b16 %v93
    %v297 = vunpack.c.l.b16 %v94
    %v298 = vunpack.c.l.b16 %v95
    %v299 = vunpack.c.l.b16 %v96
    %v300 = vunpack.c.l.b16 %v97
    %v301 = vunpack.c.l.b16 %v98
    %v302 = vunpack.c.l.b16 %v99
    %v303 = vunpack.c.l.b16 %v100
    %v304 = vunpack.c.l.b16 %v101
    %v305 = vunpack.c.l.b16 %v102
    %v306 = vunpack.c.l.b16 %v103
    %v307 = vunpack.c.l.b16 %v104
    %v308 = vunpack.c.l.b16 %v105
    %v309 = vunpack.c.l.b16 %v106
    %v310 = vunpack.c.l.b16 %v107
    %v311 = vunpack.c.l.b16 %v108
    %v312 = vunpack.c.l.b16 %v109
    %v313 = vunpack.c.l.b16 %v110
    %v314 = vunpack.c.l.b16 %v111
    %v315 = vunpack.c.l.b16 %v112
    %v316 = vunpack.c.l.b16 %v113
    %v317 = vunpack.c.l.b16 %v114
    %v318 = vunpack.c.l.b16 %v115
    %v319 = vunpack.c.l.b16 %v116
    %v320 = vunpack.c.l.b16 %v117
    %v321 = vunpack.c.l.b16 %v118
    %v322 = vunpack.c.l.b16 %v119
    %v323 = vunpack.c.l.b16 %v120
    %v324 = vunpack.c.l.b16 %v121
    %v325 = vunpack.c.l.b16 %v122
    %v326 = vunpack.c.l.b16 %v123
    %v327 = vunpack.c.l.b16 %v124
    %v328 = vunpack.c.l.b16 %v125
    %v329 = vunpack.c.l.b16 %v126
    %v330 = vunpack.c.l.b16 %v127
    %v331 = vunpack.c.l.b16 %v128
    %v332 = vunpack.c.l.b16 %v129
    %v333 = vunpack.c.l.b16 %v130
    %v334 = vunpack.c.l.b16 %v131
    %v335 = vunpack.c.l.b16 %v132
    %v336 = vunpack.c.l.b16 %v133
    %v337 = vunpack.c.l.b16 %v134
    %v338 = vunpack.c.l.b16 %v135
    %v339 = vunpack.c.l.b16 %v136
    %v340 = vunpack.c.l.b16 %v137
    %v341 = vunpack.c.l.b16 %v138
    %v342 = vunpack.c.l.b16 %v139
    %v343 = vunpack.c.l.b16 %v140
    %v344 = vunpack.c.l.b16 %v141
    %v345 = vunpack.c.l.b16 %v142
    %v346 = vunpack.c.l.b16 %v143
    %v347 = vunpack.c.l.b16 %v144
    %v348 = vunpack.c.l.b16 %v145
    %v349 = vunpack.c.l.b16 %v146
    %v350 = vunpack.c.l.b16 %v147
    %v351 = vunpack.c.l.b16 %v148
    %v352 = vunpack.c.l.b16 %v149
    %v353 = vunpack.c.l.b16 %v150
    %v354 = vunpack.c.l.b16 %v151
    %v355 = vunpack.c.l.b16 %v152
    %v356 = vunpack.c.l.b16 %v153
    %v357 = vunpack.c.l.b16 %v154
    %v358 = vunpack.c.l.b16 %v155
    %v359 = vunpack.c.l.b16 %v156
    %v360 = vunpack.c.l.b16 %v157
    %v361 = vunpack.c.l.b16 %v158
    %v362 = vpack.c.b16 %v265, %v264
    %v363 = vpack.c.b16 %v267, %v266
    %v364 = vpack.c.b16 %v269, %v268
    %v365 = vpack.c.b16 %v271, %v270
    %v366 = vpack.c.b16 %v273, %v272
    %v367 = vpack.c.b16 %v275, %v274
    %v368 = vpack.c.b16 %v277, %v276
    %v369 = vpack.c.b16 %v279, %v278
    %v370 = vpack.c.b16 %v281, %v280
    %v371 = vpack.c.b16 %v283, %v282
    %v372 = vpack.c.b16 %v285, %v284
    %v373 = vpack.c.b16 %v287, %v286
    %v374 = vpack.c.b16 %v289, %v288
    %v375 = vpack.c.b16 %v291, %v290
    %v376 = vpack.c.b16 %v293, %v292
    %v377 = vpack.c.b16 %v295, %v294
    %v378 = vpack.c.b16 %v297, %v296
    %v379 = vpack.c.b16 %v299, %v298
    %v380 = vpack.c.b16 %v301, %v300
    %v381 = vpack.c.b16 %v303, %v302
    %v382 = vpack.c.b16 %v305, %v304
    %v383 = vpack.c.b16 %v307, %v306
    %v384 = vpack.c.b16 %v309, %v308
    %v385 = vpack.c.b16 %v311, %v310
    %v386 = vpack.c.b16 %v313, %v312
    %v387 = vpack.c.b16 %v315, %v314
    %v388 = vpack.c.b16 %v317, %v316
    %v389 = vpack.c.b16 %v319, %v318
    %v390 = vpack.c.b16 %v321, %v320
    %v391 = vpack.c.b16 %v323, %v322
    %v392 = vpack.c.b16 %v325, %v324
    %v393 = vpack.c.b16 %v327, %v326
    %v394 = vpack.c.b16 %v329, %v328
    %v395 = vpack.c.b16 %v331, %v330
    %v396 = vpack.c.b16 %v333, %v332
    %v397 = vpack.c.b16 %v335, %v334
    %v398 = vpack.c.b16 %v337, %v336
    %v399 = vpack.c.b16 %v339, %v338
    %v400 = vpack.c.b16 %v341, %v340
    %v401 = vpack.c.b16 %v343, %v342
    %v402 = vpack.c.b16 %v345, %v344
    %v403 = vpack.c.b16 %v347, %v346
    %v404 = vpack.c.b16 %v349, %v348
    %v405 = vpack.c.b16 %v351, %v350
    %v406 = vpack.c.b16 %v353, %v352
    %v407 = vpack.c.b16 %v355, %v354
    %v408 = vpack.c.b16 %v357, %v356
    %v409 = vpack.c.b16 %v359, %v358
    %v410 = vpack.c.b16 %v361, %v360
    %vm460 = vcmask 130048
    %v462 = vsel %vm460, %v60, 0
    %464 = vmatprep.subr.bf16.mxu0 0
    %465 = vmatpush1.bf16.msra.mxu0 %v362
    %466 = vmatprep.subr.bf16.mxu0 0
    %467 = vmatpush1.bf16.msra.mxu0 %v363
    %468 = vmatprep.subr.bf16.mxu0 0
    %469 = vmatpush1.bf16.msra.mxu0 %v364
    %470 = vmatprep.subr.bf16.mxu0 0
    %471 = vmatpush1.bf16.msra.mxu0 %v365
    %472 = vmatprep.subr.bf16.mxu0 0
    %473 = vmatpush1.bf16.msra.mxu0 %v366
    %474 = vmatprep.subr.bf16.mxu0 0
    %475 = vmatpush1.bf16.msra.mxu0 %v367
    %476 = vmatprep.subr.bf16.mxu0 0
    %477 = vmatpush1.bf16.msra.mxu0 %v368
    %478 = vmatprep.subr.bf16.mxu0 0
    %479 = vmatpush1.bf16.msra.mxu0 %v369
    %480 = vmatprep.subr.bf16.mxu0 0
    %481 = vmatpush1.bf16.msra.mxu0 %v370
    %482 = vmatprep.subr.bf16.mxu0 0
    %483 = vmatpush1.bf16.msra.mxu0 %v371
    %484 = vmatprep.subr.bf16.mxu0 0
    %485 = vmatpush1.bf16.msra.mxu0 %v372
    %486 = vmatprep.subr.bf16.mxu0 0
    %487 = vmatpush1.bf16.msra.mxu0 %v373
    %488 = vmatprep.subr.bf16.mxu0 0
    %489 = vmatpush1.bf16.msra.mxu0 %v374
    %490 = vmatprep.subr.bf16.mxu0 0
    %491 = vmatpush1.bf16.msra.mxu0 %v375
    %492 = vmatprep.subr.bf16.mxu0 0
    %493 = vmatpush1.bf16.msra.mxu0 %v376
    %494 = vmatprep.subr.bf16.mxu0 0
    %495 = vmatpush1.bf16.msra.mxu0 %v377
    %496 = vmatprep.mubr.bf16.mxu0 %v55
    %497 = vmatmul.mubr.bf16.gmra.mrb[0].mxu0 %v54
    %v498 = vpop.f32.mrb[0].mxu0
    %v499 = vadd.f32 %v164, %v498
    %v500 = vpop.f32.mrb[0].mxu0
    %v501 = vpop.f32.mrb[0].mxu0
    %v502 = vpop.f32.mrb[0].mxu0
    %503 = vdwg.mxu0
    %504 = vmatprep.subr.bf16.mxu0 0
    %505 = vmatpush1.bf16.msra.mxu0 %v378
    %506 = vmatprep.subr.bf16.mxu0 0
    %507 = vmatpush1.bf16.msra.mxu0 %v379
    %508 = vmatprep.subr.bf16.mxu0 0
    %509 = vmatpush1.bf16.msra.mxu0 %v380
    %510 = vmatprep.subr.bf16.mxu0 0
    %511 = vmatpush1.bf16.msra.mxu0 %v381
    %512 = vmatprep.subr.bf16.mxu0 0
    %513 = vmatpush1.bf16.msra.mxu0 %v382
    %514 = vmatprep.subr.bf16.mxu0 0
    %515 = vmatpush1.bf16.msra.mxu0 %v383
    %516 = vmatprep.subr.bf16.mxu0 0
    %517 = vmatpush1.bf16.msra.mxu0 %v384
    %518 = vmatprep.subr.bf16.mxu0 0
    %519 = vmatpush1.bf16.msra.mxu0 %v385
    %520 = vmatprep.subr.bf16.mxu0 0
    %521 = vmatpush1.bf16.msra.mxu0 %v386
    %522 = vmatprep.subr.bf16.mxu0 0
    %523 = vmatpush1.bf16.msra.mxu0 %v387
    %524 = vmatprep.subr.bf16.mxu0 0
    %525 = vmatpush1.bf16.msra.mxu0 %v388
    %526 = vmatprep.subr.bf16.mxu0 0
    %527 = vmatpush1.bf16.msra.mxu0 %v389
    %528 = vmatprep.subr.bf16.mxu0 0
    %529 = vmatpush1.bf16.msra.mxu0 %v390
    %530 = vmatprep.subr.bf16.mxu0 0
    %531 = vmatpush1.bf16.msra.mxu0 %v391
    %532 = vmatprep.subr.bf16.mxu0 0
    %533 = vmatpush1.bf16.msra.mxu0 %v392
    %534 = vmatprep.subr.bf16.mxu0 0
    %535 = vmatpush1.bf16.msra.mxu0 %v393
    %536 = vmatprep.mubr.bf16.mxu0 %v57
    %537 = vmatmul.mubr.bf16.gmra.mrb[0].mxu0 %v56
    %v538 = vpop.f32.mrb[0].mxu0
    %v539 = vadd.f32 %v499, %v538
    %v540 = vpop.f32.mrb[0].mxu0
    %v541 = vpop.f32.mrb[0].mxu0
    %v542 = vpop.f32.mrb[0].mxu0
    %543 = vdwg.mxu0
    %544 = vmatprep.subr.bf16.mxu0 0
    %545 = vmatpush1.bf16.msra.mxu0 %v394
    %546 = vmatprep.subr.bf16.mxu0 0
    %547 = vmatpush1.bf16.msra.mxu0 %v395
    %548 = vmatprep.subr.bf16.mxu0 0
    %549 = vmatpush1.bf16.msra.mxu0 %v396
    %550 = vmatprep.subr.bf16.mxu0 0
    %551 = vmatpush1.bf16.msra.mxu0 %v397
    %552 = vmatprep.subr.bf16.mxu0 0
    %553 = vmatpush1.bf16.msra.mxu0 %v398
    %554 = vmatprep.subr.bf16.mxu0 0
    %555 = vmatpush1.bf16.msra.mxu0 %v399
    %556 = vmatprep.subr.bf16.mxu0 0
    %557 = vmatpush1.bf16.msra.mxu0 %v400
    %558 = vmatprep.subr.bf16.mxu0 0
    %559 = vmatpush1.bf16.msra.mxu0 %v401
    %560 = vmatprep.subr.bf16.mxu0 0
    %561 = vmatpush1.bf16.msra.mxu0 %v402
    %562 = vmatprep.subr.bf16.mxu0 0
    %563 = vmatpush1.bf16.msra.mxu0 %v403
    %564 = vmatprep.subr.bf16.mxu0 0
    %565 = vmatpush1.bf16.msra.mxu0 %v404
    %566 = vmatprep.subr.bf16.mxu0 0
    %567 = vmatpush1.bf16.msra.mxu0 %v405
    %568 = vmatprep.subr.bf16.mxu0 0
    %569 = vmatpush1.bf16.msra.mxu0 %v406
    %570 = vmatprep.subr.bf16.mxu0 0
    %571 = vmatpush1.bf16.msra.mxu0 %v407
    %572 = vmatprep.subr.bf16.mxu0 0
    %573 = vmatpush1.bf16.msra.mxu0 %v408
    %574 = vmatprep.subr.bf16.mxu0 0
    %575 = vmatpush1.bf16.msra.mxu0 %v409
    %576 = vmatprep.mubr.bf16.mxu0 %v59
    %577 = vmatmul.mubr.bf16.gmra.mrb[0].mxu0 %v58
    %v578 = vpop.f32.mrb[0].mxu0
    %v579 = vadd.f32 %v539, %v578
    %v580 = vpop.f32.mrb[0].mxu0
    %v581 = vpop.f32.mrb[0].mxu0
    %v582 = vpop.f32.mrb[0].mxu0
    %583 = vdwg.mxu0
    %584 = vmatprep.subr.bf16.mxu0 0
    %585 = vmatpush1.bf16.msra.mxu0 %v410
    %586 = vmatprep.subr.bf16.mxu0 0
    %587 = vmatpush1.bf16.msra.mxu0 0
    %588 = vmatprep.subr.bf16.mxu0 0
    %589 = vmatpush1.bf16.msra.mxu0 0
    %590 = vmatprep.subr.bf16.mxu0 0
    %591 = vmatpush1.bf16.msra.mxu0 0
    %592 = vmatprep.subr.bf16.mxu0 0
    %593 = vmatpush1.bf16.msra.mxu0 0
    %594 = vmatprep.subr.bf16.mxu0 0
    %595 = vmatpush1.bf16.msra.mxu0 0
    %596 = vmatprep.subr.bf16.mxu0 0
    %597 = vmatpush1.bf16.msra.mxu0 0
    %598 = vmatprep.subr.bf16.mxu0 0
    %599 = vmatpush1.bf16.msra.mxu0 0
    %600 = vmatprep.subr.bf16.mxu0 0
    %601 = vmatpush1.bf16.msra.mxu0 0
    %602 = vmatprep.subr.bf16.mxu0 0
    %603 = vmatpush1.bf16.msra.mxu0 0
    %604 = vmatprep.subr.bf16.mxu0 0
    %605 = vmatpush1.bf16.msra.mxu0 0
    %606 = vmatprep.subr.bf16.mxu0 0
    %607 = vmatpush1.bf16.msra.mxu0 0
    %608 = vmatprep.subr.bf16.mxu0 0
    %609 = vmatpush1.bf16.msra.mxu0 0
    %610 = vmatprep.subr.bf16.mxu0 0
    %611 = vmatpush1.bf16.msra.mxu0 0
    %612 = vmatprep.subr.bf16.mxu0 0
    %613 = vmatpush1.bf16.msra.mxu0 0
    %614 = vmatprep.subr.bf16.mxu0 0
    %615 = vmatpush1.bf16.msra.mxu0 0
    %616 = vmatprep.mubr.bf16.mxu0 0
    %617 = vmatmul.mubr.bf16.gmra.mrb[0].mxu0 %v462
    %v618 = vpop.f32.mrb[0].mxu0
    %v619 = vadd.f32 %v579, %v618
    %v620 = vpop.f32.mrb[0].mxu0
    %v621 = vpop.f32.mrb[0].mxu0
    %v622 = vpop.f32.mrb[0].mxu0
    %623 = vdwg.mxu0
    %v624 = vmax.f32 %v619, 0.0
    %v625 = vld [vmem:[%s3] sm:$0xff]
    %v626 = vld [vmem:[%s3 + $0x8] sm:$0xff]
    %v627 = vld [vmem:[%s4] sm:$0xff]
    %v628 = vld [vmem:[%s4 + $0x8] sm:$0xff]
    %630 = vset.pattern.permute.xlu0 0
    %631 = vperm.xlu0 %630, %v627
    %v632 = vpop.permute.xlu0 %631
    %635 = vset.pattern.permute.xlu0 0
    %636 = vperm.xlu0 %635, %v628
    %v637 = vpop.permute.xlu0 %636
    %639 = vmatprep.subr.mxu0 0.0
    %640 = vmatpush1.xpose.msra.mxu0 %v624
    %641 = vmatprep.subr.mxu0 0.0
    %642 = vmatpush1.xpose.msra.mxu0 0.0
    %643 = vmatprep.subr.mxu0 0.0
    %644 = vmatpush1.xpose.msra.mxu0 0.0
    %645 = vmatprep.subr.mxu0 0.0
    %646 = vmatpush1.xpose.msra.mxu0 0.0
    %647 = vmatprep.subr.mxu0 0.0
    %648 = vmatpush1.xpose.msra.mxu0 0.0
    %649 = vmatprep.subr.mxu0 0.0
    %650 = vmatpush1.xpose.msra.mxu0 0.0
    %651 = vmatprep.subr.mxu0 0.0
    %652 = vmatpush1.xpose.msra.mxu0 0.0
    %653 = vmatprep.subr.mxu0 0.0
    %654 = vmatpush1.xpose.msra.mxu0 0.0
    %655 = vmatprep.subr.mxu0 0.0
    %656 = vmatpush1.xpose.msra.mxu0 0.0
    %657 = vmatprep.subr.mxu0 0.0
    %658 = vmatpush1.xpose.msra.mxu0 0.0
    %659 = vmatprep.subr.mxu0 0.0
    %660 = vmatpush1.xpose.msra.mxu0 0.0
    %661 = vmatprep.subr.mxu0 0.0
    %662 = vmatpush1.xpose.msra.mxu0 0.0
    %663 = vmatprep.subr.mxu0 0.0
    %664 = vmatpush1.xpose.msra.mxu0 0.0
    %665 = vmatprep.subr.mxu0 0.0
    %666 = vmatpush1.xpose.msra.mxu0 0.0
    %667 = vmatprep.subr.mxu0 0.0
    %668 = vmatpush1.xpose.msra.mxu0 0.0
    %669 = vmatprep.subr.mxu0 0.0
    %670 = vmatpush1.xpose.msra.mxu0 0.0
    %671 = vmatprep.subr.mxu0 0.0
    %672 = vmatpush1.xpose.msra.mxu0 0.0
    %673 = vmatprep.subr.mxu0 0.0
    %674 = vmatpush1.xpose.msra.mxu0 0.0
    %675 = vmatprep.subr.mxu0 0.0
    %676 = vmatpush1.xpose.msra.mxu0 0.0
    %677 = vmatprep.subr.mxu0 0.0
    %678 = vmatpush1.xpose.msra.mxu0 0.0
    %679 = vmatprep.subr.mxu0 0.0
    %680 = vmatpush1.xpose.msra.mxu0 0.0
    %681 = vmatprep.subr.mxu0 0.0
    %682 = vmatpush1.xpose.msra.mxu0 0.0
    %683 = vmatprep.subr.mxu0 0.0
    %684 = vmatpush1.xpose.msra.mxu0 0.0
    %685 = vmatprep.subr.mxu0 0.0
    %686 = vmatpush1.xpose.msra.mxu0 0.0
    %687 = vmatprep.subr.mxu0 0.0
    %688 = vmatpush1.xpose.msra.mxu0 0.0
    %689 = vmatprep.subr.mxu0 0.0
    %690 = vmatpush1.xpose.msra.mxu0 0.0
    %691 = vmatprep.subr.mxu0 0.0
    %692 = vmatpush1.xpose.msra.mxu0 0.0
    %693 = vmatprep.subr.mxu0 0.0
    %694 = vmatpush1.xpose.msra.mxu0 0.0
    %695 = vmatprep.subr.mxu0 0.0
    %696 = vmatpush1.xpose.msra.mxu0 0.0
    %697 = vmatprep.subr.mxu0 0.0
    %698 = vmatpush1.xpose.msra.mxu0 0.0
    %699 = vmatprep.subr.mxu0 0.0
    %700 = vmatpush1.xpose.msra.mxu0 0.0
    %701 = vmatprep.subr.mxu0 0.0
    %702 = vmatpush1.xpose.msra.mxu0 0.0
    %703 = vmatprep.mubr.f32.mxu0 0.0
    %704 = vmatmul.mubr.f32.gmra.mrb[0].mxu0 %v625
    %v705 = vpop.f32.mrb[0].mxu0
    %v706 = vadd.f32 %v632, %v705
    %v707 = vpop.f32.mrb[0].mxu0
    %708 = vmatprep.mubr.f32.mxu0 0.0
    %709 = vmatmul.mubr.f32.gmra.mrb[0].mxu0 %v626
    %v710 = vpop.f32.mrb[0].mxu0
    %v711 = vadd.f32 %v637, %v710
    %v712 = vpop.f32.mrb[0].mxu0
    %713 = vdwg.mxu0
    %vm714 = vcmask 64512
    %715 = vst.msk [vmem:[%s5] sm:$0xff] %vm714, %v706
    %716 = vst.msk [vmem:[%s5 + $0x8] sm:$0xff] %vm714, %v711
    // Predicated region
    $region30: #{toy_model_forward.1} parent=1 // pred_check
      _
    $region31: #{toy_model_forward.1} parent=1 // pred_check_branch
      %718 = sbr.rel (0) target = $region33
    $region32: #{toy_model_forward.1} parent=1 // pred_region
      _
    $region33: #{toy_model_forward.1} parent=1 // pred_fallthru
      _
    // Predicated region
    $region34: #{toy_model_forward.1} parent=1 // pred_check
      _
    $region35: #{toy_model_forward.1} parent=1 // pred_check_branch
      %720 = sbr.rel (0) target = $region37
    $region36: #{toy_model_forward.1} parent=1 // pred_region
      _
    $region37: #{toy_model_forward.1} parent=1 // pred_fallthru
      _
    %721 = vsyncpa [#allocation3], 1
    %722 = vsyncpa [#allocation5], 1

</llo_original>
